<compile_context>
chip_gen: v6e
topology: v6e:2x2x1
jax: 0.10.0
libtpu: 0.0.40
codegen_flags: <defaults>
</compile_context>

<pallas_src>
import functools

import numpy as np
import jax
import jax.numpy as jnp
from jax.experimental import pallas as pl
from jax.experimental.pallas import tpu as pltpu

EPS = 1e-7
_LOG_EPS = float(np.log(EPS))            # ~ -16.118
_LOG_1M_EPS = float(np.log1p(-EPS))      # ~ -1e-7
_LANE = 128
_SUBLANE = 8


def _round_up(x, m):
    return ((x + m - 1) // m) * m


def _cond_sigmoid_kernel(pred_ref, tgt_ref, child_ref, root_ref, *rest,
                         batch_size, emit_clone):
    if emit_clone:
        anc_ref, part_ref, clone_ref = rest
    else:
        (part_ref,) = rest

    i = pl.program_id(0)
    tb = pred_ref.shape[0]

    # Ragged batch: the last tile may reach past B (no wrapper-side batch pad).
    # Out-of-range rows hold undefined VMEM data, so select them to 0 *before*
    # any transcendental (NaN-safe select) and exclude them from the reduction.
    row_idx = i * tb + jax.lax.broadcasted_iota(jnp.int32, (tb, 1), 0)
    valid = row_idx < batch_size                                   # [TB,1] bool
    pred = jnp.where(valid, pred_ref[...].astype(jnp.float32), 0.0)
    tgt = jnp.where(valid, tgt_ref[...].astype(jnp.float32), 0.0)

    # mask[b, j] = 1 iff j is a child of the root OR a child of any positive
    # label of sample b.  {0,1} operands are exact in bf16 -> bf16 MXU matmul.
    hits = jnp.dot(tgt.astype(jnp.bfloat16), child_ref[...],
                   preferred_element_type=jnp.float32)
    mask = ((hits + root_ref[...].astype(jnp.float32)) > 0.0).astype(jnp.float32)

    # Shared-softplus log-space BCE (one exp + one log per element):
    #   log sigmoid(x)     = min(x,0)  - log1p(exp(-|x|))
    #   log (1-sigmoid(x)) = -max(x,0) - log1p(exp(-|x|))
    # clamping each at [log(EPS), log(1-EPS)] reproduces clip(s, EPS, 1-EPS).
    sp = jnp.log1p(jnp.exp(-jnp.abs(pred)))
    logsig = jnp.minimum(pred, 0.0) - sp            # unclipped; reused for clone
    log_p = jnp.clip(logsig, _LOG_EPS, _LOG_1M_EPS)
    log_1mp = jnp.clip(-jnp.maximum(pred, 0.0) - sp, _LOG_EPS, _LOG_1M_EPS)

    elem = -(log_p * tgt + (1.0 - tgt) * mask * log_1mp)
    row_sum = jnp.sum(elem, axis=1, keepdims=True)                 # [TB, 1]
    tile_sum = jnp.sum(row_sum * valid.astype(jnp.float32))        # scalar

    # Each tile owns its lane-dense partial-sum block; no cross-step state, so
    # the batch axis can be "parallel" (second TensorCore on v7x).
    part_ref[...] = jnp.broadcast_to(tile_sum, part_ref.shape)

    if emit_clone:
        # pred_clone[b, j] = prod_{a ancestor-or-self of j} sigmoid(pred[b, a])
        #                  = exp( log_sigmoid(pred) @ ancestor_or_self )
        clone = jnp.exp(jnp.dot(logsig, anc_ref[...],
                                preferred_element_type=jnp.float32))
        clone_ref[...] = clone.astype(clone_ref.dtype)


def conditional_sigmoid(pred, target, mode, hier, *, tile_b=512,
                        vmem_budget_bytes=40 << 20, clone_dtype=jnp.float32):
    """Forward of ConditionalSigmoid. Returns (loss, pred_clone_or_None)."""
    child = hier["child"]        # [Np, Np] bf16  child[i, j] = j is child of i
    root = hier["root"]          # [1,  Np] bf16  children of the implicit root
    anc_t = hier["anc_t"]        # [Np, Np] f32   anc_t[a, j] = a is anc-or-self of j
    n_nodes = hier["n_nodes"]

    B, N = pred.shape
    assert N == n_nodes
    Np = child.shape[0]
    emit_clone = (mode != 'TRAIN')

    # Node axis: pad only when the caller's width is not already lane-aligned
    # (production N % 128 == 0 -> inputs pass through untouched, no extra HBM
    # round-trip).  No wrapper-side dtype cast either; casts happen in-kernel.
    if N != Np:
        pred_in = jnp.pad(pred, ((0, 0), (0, Np - N)))
        tgt_in = jnp.pad(target, ((0, 0), (0, Np - N)))
    else:
        pred_in, tgt_in = pred, target

    # Tiny-batch corner: keep the batch block no larger than the array.
    if B < _SUBLANE:
        pred_in = jnp.pad(pred_in, ((0, _SUBLANE - B), (0, 0)))
        tgt_in = jnp.pad(tgt_in, ((0, _SUBLANE - B), (0, 0)))
    Brows = max(B, _SUBLANE)

    # --- VMEM budget -> batch tile (safe for v7x's 64 MiB VMEM) -------------
    # Hierarchy matrices have a constant index_map (fetched once per core) but
    # still hold 2 pipeline buffers; pred/tgt(/clone) tiles are double-buffered.
    bytes_mat = 2 * (child.size * child.dtype.itemsize
                     + root.size * root.dtype.itemsize)
    per_row = Np * (pred_in.dtype.itemsize + tgt_in.dtype.itemsize)
    if emit_clone:
        bytes_mat += 2 * anc_t.size * anc_t.dtype.itemsize
        per_row += Np * jnp.dtype(clone_dtype).itemsize
    avail = max(vmem_budget_bytes - bytes_mat, 2 * _SUBLANE * per_row)
    tb_cap = max(_SUBLANE, (avail // (2 * per_row)) // _SUBLANE * _SUBLANE)
    if tb_cap >= 256:
        tb_cap = (tb_cap // 256) * 256       # full 256-wide MXU LHS on v6e/v7x
    TB = min(_round_up(tile_b, _SUBLANE), tb_cap)
    TB = max(_SUBLANE, min(TB, (Brows // _SUBLANE) * _SUBLANE))
    grid = (pl.cdiv(Brows, TB),)

    vmem_demand = bytes_mat + 2 * TB * per_row
    vmem_limit = int(min(60 << 20, max(vmem_demand + (4 << 20), 32 << 20)))

    kernel = functools.partial(_cond_sigmoid_kernel, batch_size=B,
                               emit_clone=emit_clone)

    row_spec = pl.BlockSpec((TB, Np), lambda i: (i, 0))      # pipelined per tile
    mat_spec = pl.BlockSpec((Np, Np), lambda i: (0, 0))      # VMEM-resident
    root_spec = pl.BlockSpec((1, Np), lambda i: (0, 0))
    part_spec = pl.BlockSpec((1, 1, _LANE), lambda i: (i, 0, 0))

    in_specs = [row_spec, row_spec, mat_spec, root_spec]
    inputs = [pred_in, tgt_in, child, root]
    if emit_clone:
        in_specs.append(mat_spec)
        inputs.append(anc_t)
        out_shape = (jax.ShapeDtypeStruct((grid[0], 1, _LANE), jnp.float32),
                     jax.ShapeDtypeStruct((Brows, Np), clone_dtype))
        out_specs = (part_spec, row_spec)
    else:
        out_shape = jax.ShapeDtypeStruct((grid[0], 1, _LANE), jnp.float32)
        out_specs = part_spec

    out = pl.pallas_call(
        kernel,
        grid=grid,
        in_specs=in_specs,
        out_specs=out_specs,
        out_shape=out_shape,
        compiler_params=pltpu.CompilerParams(
            # per-tile partial outputs make every grid step independent
            dimension_semantics=("parallel",),
            vmem_limit_bytes=vmem_limit),
    )(*inputs)

    if emit_clone:
        partials, clone = out
        loss = jnp.sum(partials[:, 0, 0]) * (1.0 / B)
        return loss, clone[:B, :N]
    loss = jnp.sum(out[:, 0, 0]) * (1.0 / B)
    return loss, None


# ------------------------------------------------------------------------
# Deterministic synthetic taxonomy (replaces __init__'s get_hierarchy_relations
# graph walking).  root(-1) -> {0,1}; 0 -> {2,3}; 1 -> {4,5};
# 2 -> {6,7}; 3 -> {8,9}; 4 -> {10,11}; 5 -> {12,13}.  14 nodes, 3 levels.
# ------------------------------------------------------------------------
def build_hierarchy():
    recursive_relation = {
        -1: [0, 1],
        0: [2, 3], 1: [4, 5],
        2: [6, 7], 3: [8, 9], 4: [10, 11], 5: [12, 13],
    }
    levels = {0: [0, 1], 1: [2, 3, 4, 5], 2: list(range(6, 14))}
    n_nodes = 14

    parent = {}
    for p_node, kids in recursive_relation.items():
        for k in kids:
            parent[k] = p_node

    Np = max(_LANE, _round_up(n_nodes, _LANE))

    child = np.zeros((Np, Np), np.float32)
    for p_node, kids in recursive_relation.items():
        if p_node < 0:
            continue
        for k in kids:
            child[p_node, k] = 1.0

    root = np.zeros((1, Np), np.float32)
    root[0, recursive_relation[-1]] = 1.0

    anc_t = np.zeros((Np, Np), np.float32)
    for j in range(n_nodes):
        a = j
        while a != -1:
            anc_t[a, j] = 1.0
            a = parent[a]

    hier = dict(
        # {0,1} valued -> exact in bf16; halves DMA + resident VMEM for the
        # mask-matmul operands (bf16-native MXU on v6e/v7x).
        child=jnp.asarray(child, dtype=jnp.bfloat16),
        root=jnp.asarray(root, dtype=jnp.bfloat16),
        # clone-matmul LHS (log-sigmoid) is f32, keep this operand f32 too.
        anc_t=jnp.asarray(anc_t, dtype=jnp.float32),
        n_nodes=n_nodes)
    return hier, recursive_relation, levels, parent


def _reference(pred, target, mode, recursive_relation, levels, eps=EPS):
    """Plain numpy mirror of the PyTorch forward."""
    pred = np.asarray(pred, np.float32)
    target = np.asarray(target, np.float32)
    s = 1.0 / (1.0 + np.exp(-pred))
    if mode != 'TRAIN':
        clone = s.copy()
        for level in sorted(levels):
            for node in levels[level]:
                if node in recursive_relation:
                    idx = recursive_relation[node]
                    clone[:, idx] = s[:, idx] * clone[:, [node]]
    else:
        clone = None
    mask = np.zeros_like(s)
    mask[:, recursive_relation[-1]] = 1.0
    for b, i in zip(*np.nonzero(target)):
        if int(i) in recursive_relation:
            mask[b, recursive_relation[int(i)]] = 1.0
    p = np.clip(s, eps, 1.0 - eps)
    loss = -(np.log(p) * target + (1.0 - target) * mask * np.log(1.0 - p))
    return loss.sum(axis=1).mean(), clone


if __name__ == "__main__":
    hier, recursive_relation, levels, parent = build_hierarchy()
    n_nodes = hier["n_nodes"]
    leaves = levels[2]

    B = 20                      # deliberately NOT a multiple of the batch tile
    key = jax.random.PRNGKey(0)
    pred = jax.random.normal(key, (B, n_nodes), dtype=jnp.float32)

    # multi-hot hierarchical targets: each sample marks one leaf + all ancestors
    tgt_np = np.zeros((B, n_nodes), np.float32)
    for b in range(B):
        node = leaves[b % len(leaves)]
        while node != -1:
            tgt_np[b, node] = 1.0
            node = parent[node]
    target = jnp.asarray(tgt_np)

    # EVAL: (loss, conditional node probabilities).  With B=20 the default tile
    # policy gives TB=16 -> a 2-step grid with a ragged last tile, exercising
    # the in-kernel row mask and per-tile partial-sum reduction.
    loss_ev, clone_ev = conditional_sigmoid(pred, target, 'EVAL', hier)
    jax.block_until_ready((loss_ev, clone_ev))

    # TRAIN: the clone matmul/exp and its output are compiled out entirely.
    loss_tr, clone_tr = conditional_sigmoid(pred, target, 'TRAIN', hier)
    jax.block_until_ready(loss_tr)
    assert clone_tr is None

    ref_loss, ref_clone = _reference(pred, target, 'EVAL',
                                     recursive_relation, levels)
    np.testing.assert_allclose(np.asarray(loss_ev), ref_loss, rtol=1e-5, atol=1e-5)
    np.testing.assert_allclose(np.asarray(loss_tr), ref_loss, rtol=1e-5, atol=1e-5)
    np.testing.assert_allclose(np.asarray(clone_ev), ref_clone, rtol=1e-5, atol=1e-5)

    print("KERNEL_OK")
</pallas_src>

<mosaic_0001>
module attributes {stable_mosaic.version = 11 : i64} {
  func.func @_cond_sigmoid_kernel(%arg0: i32, %arg1: memref<16x128xf32, #tpu.memory_space<vmem>>, %arg2: memref<16x128xf32, #tpu.memory_space<vmem>>, %arg3: memref<128x128xbf16, #tpu.memory_space<vmem>>, %arg4: memref<1x128xbf16, #tpu.memory_space<vmem>>, %arg5: memref<128x128xf32, #tpu.memory_space<vmem>>, %arg6: memref<1x1x128xf32, #tpu.memory_space<vmem>>, %arg7: memref<16x128xf32, #tpu.memory_space<vmem>>) attributes {dimension_semantics = [#tpu.dimension_semantics<parallel>], iteration_bounds = array<i64: 2>, scalar_prefetch = 0 : i64, scratch_operands = 0 : i64, tpu.core_type = #tpu.core_type<tc>, window_params = [{transform_indices = @transform_0, window_bounds = array<i64: 16, 128>}, {transform_indices = @transform_1, window_bounds = array<i64: 16, 128>}, {pipeline_mode = #tpu.pipeline_mode<synchronous>, transform_indices = @transform_2, window_bounds = array<i64: 128, 128>}, {pipeline_mode = #tpu.pipeline_mode<synchronous>, transform_indices = @transform_3, window_bounds = array<i64: 1, 128>}, {pipeline_mode = #tpu.pipeline_mode<synchronous>, transform_indices = @transform_4, window_bounds = array<i64: 128, 128>}, {transform_indices = @transform_5, window_bounds = array<i64: 1, 1, 128>}, {transform_indices = @transform_6, window_bounds = array<i64: 16, 128>}]} {
    %c16_i32 = arith.constant 16 : i32
    %0 = arith.muli %arg0, %c16_i32 : i32
    %1 = tpu.iota {dimensions = array<i32: 0>} : vector<16x1xi32>
    %2 = vector.broadcast %0 : i32 to vector<16x1xi32>
    %3 = arith.addi %2, %1 : vector<16x1xi32>
    %c20_i32 = arith.constant 20 : i32
    %4 = vector.broadcast %c20_i32 : i32 to vector<16x1xi32>
    %5 = arith.cmpi slt, %3, %4 : vector<16x1xi32>
    %c0 = arith.constant 0 : index
    %c0_0 = arith.constant 0 : index
    %6 = vector.load %arg1[%c0, %c0_0] : memref<16x128xf32, #tpu.memory_space<vmem>>, vector<16x128xf32>
    %cst = arith.constant 0.000000e+00 : f32
    %7 = vector.shape_cast %5 : vector<16x1xi1> to vector<16x1xi1>
    %8 = vector.broadcast %7 : vector<16x1xi1> to vector<16x128xi1>
    %9 = vector.broadcast %cst : f32 to vector<16x128xf32>
    %10 = arith.select %8, %6, %9 : vector<16x128xi1>, vector<16x128xf32>
    %c0_1 = arith.constant 0 : index
    %c0_2 = arith.constant 0 : index
    %11 = vector.load %arg2[%c0_1, %c0_2] : memref<16x128xf32, #tpu.memory_space<vmem>>, vector<16x128xf32>
    %cst_3 = arith.constant 0.000000e+00 : f32
    %12 = vector.shape_cast %5 : vector<16x1xi1> to vector<16x1xi1>
    %13 = vector.broadcast %12 : vector<16x1xi1> to vector<16x128xi1>
    %14 = vector.broadcast %cst_3 : f32 to vector<16x128xf32>
    %15 = arith.select %13, %11, %14 : vector<16x128xi1>, vector<16x128xf32>
    %16 = arith.truncf %15 : vector<16x128xf32> to vector<16x128xbf16>
    %c0_4 = arith.constant 0 : index
    %c0_5 = arith.constant 0 : index
    %17 = vector.load %arg3[%c0_4, %c0_5] : memref<128x128xbf16, #tpu.memory_space<vmem>>, vector<128x128xbf16>
    %cst_6 = arith.constant dense<0.000000e+00> : vector<16x128xf32>
    %18 = tpu.matmul %16, %17, %cst_6 {dimension_numbers = #tpu.dot_dimension_numbers<[1], [0], [0], [1], [0, 0, 1, 1], [], []>} : vector<16x128xbf16>, vector<128x128xbf16>, vector<16x128xf32> -> vector<16x128xf32>
    %c0_7 = arith.constant 0 : index
    %c0_8 = arith.constant 0 : index
    %19 = vector.load %arg4[%c0_7, %c0_8] : memref<1x128xbf16, #tpu.memory_space<vmem>>, vector<1x128xbf16>
    %20 = arith.extf %19 : vector<1x128xbf16> to vector<1x128xf32>
    %21 = vector.broadcast %20 : vector<1x128xf32> to vector<16x128xf32>
    %22 = arith.addf %18, %21 : vector<16x128xf32>
    %cst_9 = arith.constant 0.000000e+00 : f32
    %23 = vector.broadcast %cst_9 : f32 to vector<16x128xf32>
    %24 = arith.cmpf ogt, %22, %23 : vector<16x128xf32>
    %25 = arith.extui %24 : vector<16x128xi1> to vector<16x128xi32>
    %26 = arith.sitofp %25 : vector<16x128xi32> to vector<16x128xf32>
    %27 = math.absf %10 : vector<16x128xf32>
    %cst_10 = arith.constant 0.000000e+00 : f32
    %28 = vector.broadcast %cst_10 : f32 to vector<16x128xf32>
    %29 = arith.subf %28, %27 : vector<16x128xf32>
    %30 = math.exp %29 : vector<16x128xf32>
    %31 = math.log1p %30 : vector<16x128xf32>
    %cst_11 = arith.constant 0.000000e+00 : f32
    %32 = vector.broadcast %cst_11 : f32 to vector<16x128xf32>
    %33 = arith.minimumf %10, %32 : vector<16x128xf32>
    %34 = arith.subf %33, %31 : vector<16x128xf32>
    %cst_12 = arith.constant -16.1180954 : f32
    %cst_13 = arith.constant -1.00000008E-7 : f32
    %35 = vector.broadcast %cst_12 : f32 to vector<16x128xf32>
    %36 = arith.maximumf %35, %34 : vector<16x128xf32>
    %37 = vector.broadcast %cst_13 : f32 to vector<16x128xf32>
    %38 = arith.minimumf %37, %36 : vector<16x128xf32>
    %cst_14 = arith.constant 0.000000e+00 : f32
    %39 = vector.broadcast %cst_14 : f32 to vector<16x128xf32>
    %40 = arith.maximumf %10, %39 : vector<16x128xf32>
    %cst_15 = arith.constant 0.000000e+00 : f32
    %41 = vector.broadcast %cst_15 : f32 to vector<16x128xf32>
    %42 = arith.subf %41, %40 : vector<16x128xf32>
    %43 = arith.subf %42, %31 : vector<16x128xf32>
    %cst_16 = arith.constant -16.1180954 : f32
    %cst_17 = arith.constant -1.00000008E-7 : f32
    %44 = vector.broadcast %cst_16 : f32 to vector<16x128xf32>
    %45 = arith.maximumf %44, %43 : vector<16x128xf32>
    %46 = vector.broadcast %cst_17 : f32 to vector<16x128xf32>
    %47 = arith.minimumf %46, %45 : vector<16x128xf32>
    %48 = arith.mulf %38, %15 : vector<16x128xf32>
    %cst_18 = arith.constant 1.000000e+00 : f32
    %49 = vector.broadcast %cst_18 : f32 to vector<16x128xf32>
    %50 = arith.subf %49, %15 : vector<16x128xf32>
    %51 = arith.mulf %50, %26 : vector<16x128xf32>
    %52 = arith.mulf %51, %47 : vector<16x128xf32>
    %53 = arith.addf %48, %52 : vector<16x128xf32>
    %cst_19 = arith.constant 0.000000e+00 : f32
    %54 = vector.broadcast %cst_19 : f32 to vector<16x128xf32>
    %55 = arith.subf %54, %53 : vector<16x128xf32>
    %cst_20 = arith.constant dense<0.000000e+00> : vector<16xf32>
    %56 = vector.multi_reduction <add>, %55, %cst_20 [1] : vector<16x128xf32> to vector<16xf32>
    %57 = vector.shape_cast %56 : vector<16xf32> to vector<16x1xf32>
    %58 = arith.extui %5 : vector<16x1xi1> to vector<16x1xi32>
    %59 = arith.sitofp %58 : vector<16x1xi32> to vector<16x1xf32>
    %60 = arith.mulf %57, %59 : vector<16x1xf32>
    %61 = vector.shape_cast %60 : vector<16x1xf32> to vector<1x16x1xf32>
    %cst_21 = arith.constant dense<0.000000e+00> : vector<1xf32>
    %62 = vector.multi_reduction <add>, %61, %cst_21 [1, 2] : vector<1x16x1xf32> to vector<1xf32>
    %63 = vector.shape_cast %62 : vector<1xf32> to vector<1x1x1xf32>
    %64 = vector.extract %63[0, 0, 0] : f32 from vector<1x1x1xf32>
    %65 = vector.broadcast %64 : f32 to vector<1x1x128xf32>
    %c0_22 = arith.constant 0 : index
    %c0_23 = arith.constant 0 : index
    %c0_24 = arith.constant 0 : index
    %66 = vector.load %arg6[%c0_22, %c0_23, %c0_24] : memref<1x1x128xf32, #tpu.memory_space<vmem>>, vector<1x1x128xf32>
    tpu.vector_store %arg6[%c0_22, %c0_23, %c0_24], %65 {strides = array<i32>} : memref<1x1x128xf32, #tpu.memory_space<vmem>>, vector<1x1x128xf32>,
    %c0_25 = arith.constant 0 : index
    %c0_26 = arith.constant 0 : index
    %67 = vector.load %arg5[%c0_25, %c0_26] : memref<128x128xf32, #tpu.memory_space<vmem>>, vector<128x128xf32>
    %cst_27 = arith.constant dense<0.000000e+00> : vector<16x128xf32>
    %68 = tpu.matmul %34, %67, %cst_27 {dimension_numbers = #tpu.dot_dimension_numbers<[1], [0], [0], [1], [0, 0, 1, 1], [], []>} : vector<16x128xf32>, vector<128x128xf32>, vector<16x128xf32> -> vector<16x128xf32>
    %69 = math.exp %68 : vector<16x128xf32>
    %c0_28 = arith.constant 0 : index
    %c0_29 = arith.constant 0 : index
    %70 = vector.load %arg7[%c0_28, %c0_29] : memref<16x128xf32, #tpu.memory_space<vmem>>, vector<16x128xf32>
    tpu.vector_store %arg7[%c0_28, %c0_29], %69 {strides = array<i32>} : memref<16x128xf32, #tpu.memory_space<vmem>>, vector<16x128xf32>,
    return
  }
  func.func @transform_0(%arg0: i32) -> (i32, i32) {
    %c0_i32 = arith.constant 0 : i32
    %c0_i32_0 = arith.constant 0 : i32
    return %arg0, %c0_i32 : i32, i32
  }
  func.func @transform_1(%arg0: i32) -> (i32, i32) {
    %c0_i32 = arith.constant 0 : i32
    %c0_i32_0 = arith.constant 0 : i32
    return %arg0, %c0_i32 : i32, i32
  }
  func.func @transform_2(%arg0: i32) -> (i32, i32) {
    %c0_i32 = arith.constant 0 : i32
    %c0_i32_0 = arith.constant 0 : i32
    %c0_i32_1 = arith.constant 0 : i32
    return %c0_i32, %c0_i32_0 : i32, i32
  }
  func.func @transform_3(%arg0: i32) -> (i32, i32) {
    %c0_i32 = arith.constant 0 : i32
    %c0_i32_0 = arith.constant 0 : i32
    %c0_i32_1 = arith.constant 0 : i32
    return %c0_i32, %c0_i32_0 : i32, i32
  }
  func.func @transform_4(%arg0: i32) -> (i32, i32) {
    %c0_i32 = arith.constant 0 : i32
    %c0_i32_0 = arith.constant 0 : i32
    %c0_i32_1 = arith.constant 0 : i32
    return %c0_i32, %c0_i32_0 : i32, i32
  }
  func.func @transform_5(%arg0: i32) -> (i32, i32, i32) {
    %c0_i32 = arith.constant 0 : i32
    %c0_i32_0 = arith.constant 0 : i32
    %c0_i32_1 = arith.constant 0 : i32
    return %arg0, %c0_i32, %c0_i32_0 : i32, i32, i32
  }
  func.func @transform_6(%arg0: i32) -> (i32, i32) {
    %c0_i32 = arith.constant 0 : i32
    %c0_i32_0 = arith.constant 0 : i32
    return %arg0, %c0_i32 : i32, i32
  }
}

</mosaic_0001>

<llo_original>
// kernel: tpu_custom_call.1
$region0: #{tpu_custom_call.1}
  #allocation0 [shape = 'u32[]', space=smem, size = 0x4, offset = 0x4, fixed_abs, tag = 'smem constant byte address 0x4 - core index']
  #allocation1 [shape = 'u32[144,128]{1,0:T(1,128)}', space=vmem, size = 0x12000, scoped, tag = 'internal scratch']
  %s0 = inlined_call_operand.hbm [shape: f32[20,128], index: 0, kind: input, shape index: {}]
  %s1 = inlined_call_operand.hbm [shape: f32[20,128], index: 1, kind: input, shape index: {}]
  %s2 = inlined_call_operand.hbm [shape: bf16[128,128], index: 2, kind: input, shape index: {}]
  %s3 = inlined_call_operand.vmem [shape: bf16[1,128], index: 3, kind: input, shape index: {}]
  %s4 = inlined_call_operand.hbm [shape: f32[128,128], index: 4, kind: input, shape index: {}]
  %s5 = inlined_call_operand.hbm [shape: f32[2,1,128], index: 5, kind: output, shape index: {0}]
  %s6 = inlined_call_operand.hbm [shape: f32[20,128], index: 6, kind: output, shape index: {1}]
  %7 = xla_tuple %s5, %s6
  %s8 = sld [smem:[#allocation0]]
  $region77: #{tpu_custom_call.1} parent=0
    _
  %s10 = ssub.s32 1, %s8
  %s11 = scalar_select 0, %s10, %s8
  $region1: #{tpu_custom_call.1} parent=0
    #allocation2 [shape = 'u8[16384]{0}', space=vmem, size = 0x4000, scoped, tag = 'input window, operand 0']
    #allocation3 [shape = 's32[2]{0}', space=sflag, size = 0x8, scoped, tag = 'scoped memory for tpu_custom_call.1']
    #allocation4 [shape = 's32[2]{0}', space=sflag, size = 0x8, scoped, tag = 'scoped memory for tpu_custom_call.1']
    #allocation5 [shape = 'u8[16384]{0}', space=vmem, size = 0x4000, scoped, tag = 'input window, operand 1']
    #allocation6 [shape = 's32[2]{0}', space=sflag, size = 0x8, scoped, tag = 'scoped memory for tpu_custom_call.1']
    #allocation7 [shape = 'u8[32768]{0}', space=vmem, size = 0x8000, scoped, tag = 'input window, operand 2, single buffered']
    #allocation8 [shape = 'u8[65536]{0}', space=vmem, size = 0x10000, scoped, tag = 'input window, operand 4, single buffered']
    #allocation9 [shape = 's32[1]{0}', space=sflag, size = 0x4, scoped, tag = 'scoped memory for tpu_custom_call.1']
    #allocation10 [shape = 'u8[1024]{0}', space=vmem, size = 0x400, scoped, tag = 'output window, operand 0']
    #allocation11 [shape = 'u8[16384]{0}', space=vmem, size = 0x4000, scoped, tag = 'output window, operand 1']
    #allocation12 [shape = 's32[2]{0}', space=sflag, size = 0x8, scoped, tag = 'scoped memory for tpu_custom_call.1']
    %12 = vsyncpa [#allocation3], 0
    %s13 = scalar_lea.sflag [#allocation3], 1
    %14 = vsyncpa %s13, 0
    %15 = vsyncpa [#allocation6], 0
    %s16 = scalar_lea.sflag [#allocation6], 1
    %17 = vsyncpa %s16, 0
    %18 = vsyncpa [#allocation9], 0
    %19 = vsyncpa [#allocation4], 0
    %s20 = scalar_lea.sflag [#allocation4], 1
    %21 = vsyncpa %s20, 0
    %22 = vsyncpa [#allocation12], 0
    %s23 = scalar_lea.sflag [#allocation12], 1
    %24 = vsyncpa %s23, 0
    loop: start=0, step=1, limit=4
    $region2: #{tpu_custom_call.1} parent=1 // loop_pre_header
      _
    $region3: #{tpu_custom_call.1} parent=1 // loop_header
      %s26 = sphi 0, %s30
      %p27 = scmp.ge.s32.totalorder %s26, 4
      %s36 = sphi 0, %s38
      %s39 = sphi 0, %s36
      %s40 = sphi 0, %s39
      %s56 = sphi 0, %s40
      %s62 = sphi 0, %s64
      %s65 = sphi 0, %s62
      %s66 = sphi 0, %s65
      %s82 = sphi 0, %s66
      %s86 = sphi 0, %s86
      %s88 = sphi 0, %s86
      %s89 = sphi 0, %s88
      %s103 = sphi 0, %s89
      %s107 = sphi 0, %s107
      %s109 = sphi 0, %s107
      %s110 = sphi 0, %s109
      %s124 = sphi 0, %s110
      %s128 = sphi 0, %s128
      %s130 = sphi 0, %s128
      %s131 = sphi 0, %s130
      %s145 = sphi 0, %s131
      %s151 = sphi 0, %s153
      %s154 = sphi 0, %s151
      %s155 = sphi 0, %s154
      %s171 = sphi 0, %s155
      %s177 = sphi 0, %s179
      %s180 = sphi 0, %s177
      %s181 = sphi 0, %s180
      %s197 = sphi 0, %s181
    $region4: #{tpu_custom_call.1} parent=1 // loop_header_branch
      %29 = sbr.rel (%p27) target = $region8
    $region5: #{tpu_custom_call.1} parent=1 // loop_body
      %s31 = ssub.s32 %s26, 1
      %s32 = ssub.s32 %s26, 2
      %s33 = sadd.s32 %s26, 1
      %s34 = ssub.s32 %s26, %s33
      %p35 = scmp.eq.s32.totalorder %s34, 0
      %s37 = sadd.s32 %s36, 1
      %s38 = scalar_select %p35, %s36, %s37
      %p41 = pneg %p35
      %p42 = scmp.eq.s32.totalorder %s26, 1
      %p43 = por %p41, %p42
      %p44 = scmp.ne.s32.totalorder %s36, %s39
      %p45 = scmp.eq.s32.totalorder %s26, 0
      %p46 = por %p44, %p45
      %p47 = scmp.ne.s32.totalorder %s36, %s39
      %p48 = scmp.eq.s32.totalorder %s31, 1
      %p49 = por %p47, %p48
      %p50 = scmp.ne.s32.totalorder %s39, %s40
      %p51 = scmp.eq.s32.totalorder %s31, 0
      %p52 = por %p50, %p51
      %p53 = scmp.ne.s32.totalorder %s39, %s40
      %p54 = scmp.eq.s32.totalorder %s32, 1
      %p55 = por %p53, %p54
      %p57 = scmp.ne.s32.totalorder %s40, %s56
      %p58 = scmp.eq.s32.totalorder %s32, 0
      %p59 = por %p57, %p58
      %s60 = ssub.s32 %s26, %s33
      %p61 = scmp.eq.s32.totalorder %s60, 0
      %s63 = sadd.s32 %s62, 1
      %s64 = scalar_select %p61, %s62, %s63
      %p67 = pneg %p61
      %p68 = scmp.eq.s32.totalorder %s26, 1
      %p69 = por %p67, %p68
      %p70 = scmp.ne.s32.totalorder %s62, %s65
      %p71 = scmp.eq.s32.totalorder %s26, 0
      %p72 = por %p70, %p71
      %p73 = scmp.ne.s32.totalorder %s62, %s65
      %p74 = scmp.eq.s32.totalorder %s31, 1
      %p75 = por %p73, %p74
      %p76 = scmp.ne.s32.totalorder %s65, %s66
      %p77 = scmp.eq.s32.totalorder %s31, 0
      %p78 = por %p76, %p77
      %p79 = scmp.ne.s32.totalorder %s65, %s66
      %p80 = scmp.eq.s32.totalorder %s32, 1
      %p81 = por %p79, %p80
      %p83 = scmp.ne.s32.totalorder %s66, %s82
      %p84 = scmp.eq.s32.totalorder %s32, 0
      %p85 = por %p83, %p84
      %s87 = sadd.s32 %s86, 1
      %p90 = scmp.eq.s32.totalorder %s26, 1
      %p91 = scmp.ne.s32.totalorder %s86, %s88
      %p92 = scmp.eq.s32.totalorder %s26, 0
      %p93 = por %p91, %p92
      %p94 = scmp.ne.s32.totalorder %s86, %s88
      %p95 = scmp.eq.s32.totalorder %s31, 1
      %p96 = por %p94, %p95
      %p97 = scmp.ne.s32.totalorder %s88, %s89
      %p98 = scmp.eq.s32.totalorder %s31, 0
      %p99 = por %p97, %p98
      %p100 = scmp.ne.s32.totalorder %s88, %s89
      %p101 = scmp.eq.s32.totalorder %s32, 1
      %p102 = por %p100, %p101
      %p104 = scmp.ne.s32.totalorder %s89, %s103
      %p105 = scmp.eq.s32.totalorder %s32, 0
      %p106 = por %p104, %p105
      %s108 = sadd.s32 %s107, 1
      %p111 = scmp.eq.s32.totalorder %s26, 1
      %p112 = scmp.ne.s32.totalorder %s107, %s109
      %p113 = scmp.eq.s32.totalorder %s26, 0
      %p114 = por %p112, %p113
      %p115 = scmp.ne.s32.totalorder %s107, %s109
      %p116 = scmp.eq.s32.totalorder %s31, 1
      %p117 = por %p115, %p116
      %p118 = scmp.ne.s32.totalorder %s109, %s110
      %p119 = scmp.eq.s32.totalorder %s31, 0
      %p120 = por %p118, %p119
      %p121 = scmp.ne.s32.totalorder %s109, %s110
      %p122 = scmp.eq.s32.totalorder %s32, 1
      %p123 = por %p121, %p122
      %p125 = scmp.ne.s32.totalorder %s110, %s124
      %p126 = scmp.eq.s32.totalorder %s32, 0
      %p127 = por %p125, %p126
      %s129 = sadd.s32 %s128, 1
      %p132 = scmp.eq.s32.totalorder %s26, 1
      %p133 = scmp.ne.s32.totalorder %s128, %s130
      %p134 = scmp.eq.s32.totalorder %s26, 0
      %p135 = por %p133, %p134
      %p136 = scmp.ne.s32.totalorder %s128, %s130
      %p137 = scmp.eq.s32.totalorder %s31, 1
      %p138 = por %p136, %p137
      %p139 = scmp.ne.s32.totalorder %s130, %s131
      %p140 = scmp.eq.s32.totalorder %s31, 0
      %p141 = por %p139, %p140
      %p142 = scmp.ne.s32.totalorder %s130, %s131
      %p143 = scmp.eq.s32.totalorder %s32, 1
      %p144 = por %p142, %p143
      %p146 = scmp.ne.s32.totalorder %s131, %s145
      %p147 = scmp.eq.s32.totalorder %s32, 0
      %p148 = por %p146, %p147
      %s149 = ssub.s32 %s26, %s33
      %p150 = scmp.eq.s32.totalorder %s149, 0
      %s152 = sadd.s32 %s151, 1
      %s153 = scalar_select %p150, %s151, %s152
      %p156 = pneg %p150
      %p157 = scmp.eq.s32.totalorder %s26, 1
      %p158 = por %p156, %p157
      %p159 = scmp.ne.s32.totalorder %s151, %s154
      %p160 = scmp.eq.s32.totalorder %s26, 0
      %p161 = por %p159, %p160
      %p162 = scmp.ne.s32.totalorder %s151, %s154
      %p163 = scmp.eq.s32.totalorder %s31, 1
      %p164 = por %p162, %p163
      %p165 = scmp.ne.s32.totalorder %s154, %s155
      %p166 = scmp.eq.s32.totalorder %s31, 0
      %p167 = por %p165, %p166
      %p168 = scmp.ne.s32.totalorder %s154, %s155
      %p169 = scmp.eq.s32.totalorder %s32, 1
      %p170 = por %p168, %p169
      %p172 = scmp.ne.s32.totalorder %s155, %s171
      %p173 = scmp.eq.s32.totalorder %s32, 0
      %p174 = por %p172, %p173
      %s175 = ssub.s32 %s26, %s33
      %p176 = scmp.eq.s32.totalorder %s175, 0
      %s178 = sadd.s32 %s177, 1
      %s179 = scalar_select %p176, %s177, %s178
      %p182 = pneg %p176
      %p183 = scmp.eq.s32.totalorder %s26, 1
      %p184 = por %p182, %p183
      %p185 = scmp.ne.s32.totalorder %s177, %s180
      %p186 = scmp.eq.s32.totalorder %s26, 0
      %p187 = por %p185, %p186
      %p188 = scmp.ne.s32.totalorder %s177, %s180
      %p189 = scmp.eq.s32.totalorder %s31, 1
      %p190 = por %p188, %p189
      %p191 = scmp.ne.s32.totalorder %s180, %s181
      %p192 = scmp.eq.s32.totalorder %s31, 0
      %p193 = por %p191, %p192
      %p194 = scmp.ne.s32.totalorder %s180, %s181
      %p195 = scmp.eq.s32.totalorder %s32, 1
      %p196 = por %p194, %p195
      %p198 = scmp.ne.s32.totalorder %s181, %s197
      %p199 = scmp.eq.s32.totalorder %s32, 0
      %p200 = por %p198, %p199
      %p201 = scmp.le.s32.totalorder 1, %s26
      %p202 = scmp.lt.s32.totalorder %s26, 3
      %p203 = pnand %p201, %p202
      %p204 = pneg %p203
      // Predicated region
      $region9: #{tpu_custom_call.1} parent=5 // pred_check
        _
      $region10: #{tpu_custom_call.1} parent=5 // pred_check_branch
        %206 = sbr.rel (%p203) target = $region12
      $region11: #{tpu_custom_call.1} parent=5 // pred_region
        %s207 = ssub.s32 %s26, 1
        // Predicated region
        $region13: #{tpu_custom_call.1} parent=11 // pred_check
          %p208 = pneg %p99
        $region14: #{tpu_custom_call.1} parent=11 // pred_check_branch
          %210 = sbr.rel (%p208) target = $region16
        $region15: #{tpu_custom_call.1} parent=11 // pred_region
          %s212 = ssub.s32 1024, 1024
          %213 = vsyncadd [#allocation6], %s212
          %s214 = sshll.u32 [#allocation7], 4
          %s215 = int_to_ptr.vmem [resolvable:$true] %s214
          %220 = dma.hbm_to_vmem [thread:$0]  %s2, 1024, %s215, [#allocation6], 64, 64, 4
        $region16: #{tpu_custom_call.1} parent=11 // pred_fallthru
          _
        // Predicated region
        $region17: #{tpu_custom_call.1} parent=11 // pred_check
          %p221 = pneg %p120
        $region18: #{tpu_custom_call.1} parent=11 // pred_check_branch
          %223 = sbr.rel (%p221) target = $region20
        $region19: #{tpu_custom_call.1} parent=11 // pred_region
          _
        $region20: #{tpu_custom_call.1} parent=11 // pred_fallthru
          _
        // Predicated region
        $region21: #{tpu_custom_call.1} parent=11 // pred_check
          %p224 = pneg %p141
        $region22: #{tpu_custom_call.1} parent=11 // pred_check_branch
          %226 = sbr.rel (%p224) target = $region24
        $region23: #{tpu_custom_call.1} parent=11 // pred_region
          %s228 = ssub.s32 2048, 2048
          %229 = vsyncadd [#allocation9], %s228
          %s230 = sshll.u32 [#allocation8], 4
          %s231 = int_to_ptr.vmem [resolvable:$true] %s230
          %236 = dma.hbm_to_vmem [thread:$0]  %s4, 2048, %s231, [#allocation9], 128, 128, 8
        $region24: #{tpu_custom_call.1} parent=11 // pred_fallthru
          _
      $region12: #{tpu_custom_call.1} parent=5 // pred_fallthru
        _
      %p237 = scmp.lt.s32.totalorder %s26, 2
      // Predicated region
      $region25: #{tpu_custom_call.1} parent=5 // pred_check
        %p238 = pneg %p237
      $region26: #{tpu_custom_call.1} parent=5 // pred_check_branch
        %240 = sbr.rel (%p238) target = $region28
      $region27: #{tpu_custom_call.1} parent=5 // pred_region
        // Predicated region
        $region29: #{tpu_custom_call.1} parent=27 // pred_check
          %p241 = pneg %p46
        $region30: #{tpu_custom_call.1} parent=27 // pred_check_branch
          %243 = sbr.rel (%p241) target = $region32
        $region31: #{tpu_custom_call.1} parent=27 // pred_region
          %s244 = sand.u32 %s36, 1
          %s245 = scalar_lea.sflag [#allocation3], %s244
          %s246 = sand.u32 %s36, 1
          %s247 = smul.addr %s246, 16
          %s248 = scalar_lea.vmem [#allocation2], %s247
          %s249 = smul.u32 2, %s26
          %s250 = ssub.s32 3, %s249
          %p251 = scmp.lt.s32.totalorder %s250, 2
          %s252 = scalar_select %p251, %s250, 2
          %s253 = smul.u32 128, %s252
          %s255 = ssub.s32 256, %s253
          %256 = vsyncadd %s245, %s255
          %p257 = scmp.ne.s32.totalorder 0, %s253
          %s258 = smul.addr %s249, 128
          %s259 = scalar_lea.hbm %s0, %s258
          %s260 = smul.u32 8, %s252
          %s261 = sshll.u32 %s248, 4
          %s262 = int_to_ptr.vmem [resolvable:$true] %s261
          %s263 = sshll.u32 %s260, 4
          %267 = dma.hbm_to_vmem [thread:$0]  (%p257), %s259, %s263, %s262, %s245, 128, 128, 8
        $region32: #{tpu_custom_call.1} parent=27 // pred_fallthru
          _
        // Predicated region
        $region33: #{tpu_custom_call.1} parent=27 // pred_check
          %p268 = pneg %p72
        $region34: #{tpu_custom_call.1} parent=27 // pred_check_branch
          %270 = sbr.rel (%p268) target = $region36
        $region35: #{tpu_custom_call.1} parent=27 // pred_region
          %s271 = sand.u32 %s26, 1
          %s272 = scalar_lea.sflag [#allocation6], %s271
          %s273 = sand.u32 %s62, 1
          %s274 = smul.addr %s273, 16
          %s275 = scalar_lea.vmem [#allocation5], %s274
          %s276 = smul.u32 2, %s26
          %s277 = ssub.s32 3, %s276
          %p278 = scmp.lt.s32.totalorder %s277, 2
          %s279 = scalar_select %p278, %s277, 2
          %s280 = smul.u32 128, %s279
          %s282 = ssub.s32 256, %s280
          %283 = vsyncadd %s272, %s282
          %p284 = scmp.ne.s32.totalorder 0, %s280
          %s285 = smul.addr %s276, 128
          %s286 = scalar_lea.hbm %s1, %s285
          %s287 = smul.u32 8, %s279
          %s288 = sshll.u32 %s275, 4
          %s289 = int_to_ptr.vmem [resolvable:$true] %s288
          %s290 = sshll.u32 %s287, 4
          %294 = dma.hbm_to_vmem [thread:$0]  (%p284), %s286, %s290, %s289, %s272, 128, 128, 8
        $region36: #{tpu_custom_call.1} parent=27 // pred_fallthru
          _
      $region28: #{tpu_custom_call.1} parent=5 // pred_fallthru
        _
      %p295 = scmp.le.s32.totalorder 1, %s26
      %p296 = scmp.lt.s32.totalorder %s26, 3
      %p297 = pnand %p295, %p296
      %p298 = pneg %p297
      // Predicated region
      $region37: #{tpu_custom_call.1} parent=5 // pred_check
        _
      $region38: #{tpu_custom_call.1} parent=5 // pred_check_branch
        %300 = sbr.rel (%p297) target = $region40
      $region39: #{tpu_custom_call.1} parent=5 // pred_region
        %s301 = ssub.s32 %s26, 1
        %s302 = sand.u32 %s39, 1
        %s303 = scalar_lea.sflag [#allocation3], %s302
        %s304 = sand.u32 %s39, 1
        %s305 = smul.addr %s304, 16
        %s306 = scalar_lea.vmem [#allocation2], %s305
        // Predicated region
        $region41: #{tpu_custom_call.1} parent=39 // pred_check
          %p307 = pneg %p52
        $region42: #{tpu_custom_call.1} parent=39 // pred_check_branch
          %309 = sbr.rel (%p307) target = $region44
        $region43: #{tpu_custom_call.1} parent=39 // pred_region
          %310 = dma.done %s303, 256
        $region44: #{tpu_custom_call.1} parent=39 // pred_fallthru
          _
        %s311 = sand.u32 %s31, 1
        %s312 = scalar_lea.sflag [#allocation6], %s311
        %s313 = sand.u32 %s65, 1
        %s314 = smul.addr %s313, 16
        %s315 = scalar_lea.vmem [#allocation5], %s314
        // Predicated region
        $region45: #{tpu_custom_call.1} parent=39 // pred_check
          %p316 = pneg %p78
        $region46: #{tpu_custom_call.1} parent=39 // pred_check_branch
          %318 = sbr.rel (%p316) target = $region48
        $region47: #{tpu_custom_call.1} parent=39 // pred_region
          %319 = dma.done %s312, 256
        $region48: #{tpu_custom_call.1} parent=39 // pred_fallthru
          _
        // Predicated region
        $region49: #{tpu_custom_call.1} parent=39 // pred_check
          %p320 = pneg %p99
        $region50: #{tpu_custom_call.1} parent=39 // pred_check_branch
          %322 = sbr.rel (%p320) target = $region52
        $region51: #{tpu_custom_call.1} parent=39 // pred_region
          %323 = dma.done [#allocation6], 1024
        $region52: #{tpu_custom_call.1} parent=39 // pred_fallthru
          _
        // Predicated region
        $region53: #{tpu_custom_call.1} parent=39 // pred_check
          %p324 = pneg %p141
        $region54: #{tpu_custom_call.1} parent=39 // pred_check_branch
          %326 = sbr.rel (%p324) target = $region56
        $region55: #{tpu_custom_call.1} parent=39 // pred_region
          %327 = dma.done [#allocation9], 2048
        $region56: #{tpu_custom_call.1} parent=39 // pred_fallthru
          _
        %s328 = sand.u32 %s39, 1
        %s329 = scalar_lea.sflag [#allocation3], %s328
        %s330 = sand.u32 %s39, 1
        %s331 = smul.addr %s330, 16
        %s332 = scalar_lea.vmem [#allocation2], %s331
        %p333 = pneg %p52
        %p334 = pneg %p49
        %s335 = sand.u32 %s31, 1
        %s336 = scalar_lea.sflag [#allocation6], %s335
        %s337 = sand.u32 %s65, 1
        %s338 = smul.addr %s337, 16
        %s339 = scalar_lea.vmem [#allocation5], %s338
        %p340 = pneg %p78
        %p341 = pneg %p75
        %p342 = pneg %p99
        %p343 = pneg %p96
        %p344 = pneg %p120
        %p345 = pneg %p117
        %p346 = pneg %p141
        %p347 = pneg %p138
        %p348 = pneg %p167
        %p349 = pneg %p164
        %s350 = sand.u32 %s154, 1
        %s351 = scalar_lea.sflag [#allocation4], %s350
        %s352 = sand.u32 %s154, 1
        %s353 = scalar_lea.vmem [#allocation10], %s352
        %p354 = pneg %p193
        %p355 = pneg %p190
        %s356 = sand.u32 %s180, 1
        %s357 = scalar_lea.sflag [#allocation12], %s356
        %s358 = sand.u32 %s180, 1
        %s359 = smul.addr %s358, 16
        %s360 = scalar_lea.vmem [#allocation11], %s359
        %s361 = smul.u32 2, %s31
        %s362 = ssub.s32 3, %s361
        %p363 = scmp.lt.s32.totalorder %s362, 2
        %s364 = scalar_select %p363, %s362, 2
        %s365 = smul.u32 128, %s364
        %s366 = smul.u32 2, %s31
        %s367 = ssub.s32 3, %s366
        %p368 = scmp.lt.s32.totalorder %s367, 2
        %s369 = scalar_select %p368, %s367, 2
        %s370 = smul.u32 128, %s369
        %s371 = smul.u32 2, %s31
        %s372 = ssub.s32 3, %s371
        %p373 = scmp.lt.s32.totalorder %s372, 2
        %s374 = scalar_select %p373, %s372, 2
        %s375 = smul.u32 128, %s374
        %s377 = smul.u32 %s31, 16
        %v378 = vlaneseq
        %v379 = vshrl.u32 %v378, 7
        %v380 = vadd.s32 %v379, 8
        %v381 = vstv %s377
        %v382 = vadd.s32 %v381, %v379
        %v383 = vadd.s32 %v381, %v380
        %vm384 = vcmp.lt.s32.totalorder %v382, 20
        %vm385 = vcmp.lt.s32.totalorder %v383, 20
        %v386 = vld [vmem:[%s306] sm:$0xff]
        %v387 = vld [vmem:[%s306 + $0x8] sm:$0xff]
        %v388 = vsel %vm384, 1, 0
        %v389 = vsel %vm385, 1, 0
        %vm390 = vcmp.eq.s32.totalorder %v388, 1
        %vm391 = vcmp.eq.s32.totalorder %v389, 1
        %v392 = vsel %vm390, %v386, 0.0
        %v393 = vsel %vm391, %v387, 0.0
        %v394 = vld [vmem:[%s315] sm:$0xff]
        %v395 = vld [vmem:[%s315 + $0x8] sm:$0xff]
        %v396 = vsel %vm390, %v394, 0.0
        %v397 = vsel %vm391, %v395, 0.0
        %v398 = vpack.c.bf16 %v397, %v396
        %v399 = vld [vmem:[#allocation7] sm:$0xf]
        %v400 = vld [vmem:[#allocation7 + $0x4] sm:$0xf]
        %v401 = vld [vmem:[#allocation7 + $0x8] sm:$0xf]
        %v402 = vld [vmem:[#allocation7 + $0xc] sm:$0xf]
        %v403 = vld [vmem:[#allocation7 + $0x10] sm:$0xf]
        %v404 = vld [vmem:[#allocation7 + $0x14] sm:$0xf]
        %v405 = vld [vmem:[#allocation7 + $0x18] sm:$0xf]
        %v406 = vld [vmem:[#allocation7 + $0x1c] sm:$0xf]
        %v407 = vld [vmem:[#allocation7 + $0x20] sm:$0xf]
        %v408 = vld [vmem:[#allocation7 + $0x24] sm:$0xf]
        %v409 = vld [vmem:[#allocation7 + $0x28] sm:$0xf]
        %v410 = vld [vmem:[#allocation7 + $0x2c] sm:$0xf]
        %v411 = vld [vmem:[#allocation7 + $0x30] sm:$0xf]
        %v412 = vld [vmem:[#allocation7 + $0x34] sm:$0xf]
        %v413 = vld [vmem:[#allocation7 + $0x38] sm:$0xf]
        %v414 = vld [vmem:[#allocation7 + $0x3c] sm:$0xf]
        %v415 = vld [vmem:[%s3] sm:$0x1]
        %v416 = vunpack.c.l.bf16 %v415
        %v417 = vlaneseq
        %v418 = vshrl.u32 %v417, 7
        %v419 = vsub.s32 0, %v418
        %v420 = vrot.slane %v416, %v419
        %v437 = vunpack.c.l.b16 %v399
        %v438 = vunpack.c.l.b16 %v400
        %v439 = vunpack.c.l.b16 %v401
        %v440 = vunpack.c.l.b16 %v402
        %v441 = vunpack.c.l.b16 %v403
        %v442 = vunpack.c.l.b16 %v404
        %v443 = vunpack.c.l.b16 %v405
        %v444 = vunpack.c.l.b16 %v406
        %v445 = vunpack.c.l.b16 %v407
        %v446 = vunpack.c.l.b16 %v408
        %v447 = vunpack.c.l.b16 %v409
        %v448 = vunpack.c.l.b16 %v410
        %v449 = vunpack.c.l.b16 %v411
        %v450 = vunpack.c.l.b16 %v412
        %v451 = vunpack.c.l.b16 %v413
        %v452 = vunpack.c.l.b16 %v414
        %v453 = vpack.c.b16 %v438, %v437
        %v454 = vpack.c.b16 %v440, %v439
        %v455 = vpack.c.b16 %v442, %v441
        %v456 = vpack.c.b16 %v444, %v443
        %v457 = vpack.c.b16 %v446, %v445
        %v458 = vpack.c.b16 %v448, %v447
        %v459 = vpack.c.b16 %v450, %v449
        %v460 = vpack.c.b16 %v452, %v451
        %469 = vmatprep.subr.bf16.mxu0 0
        %470 = vmatpush1.bf16.msra.mxu0 %v460
        %471 = vmatprep.subr.bf16.mxu0 0
        %472 = vmatpush1.bf16.msra.mxu0 %v459
        %473 = vmatprep.subr.bf16.mxu0 0
        %474 = vmatpush1.bf16.msra.mxu0 %v458
        %475 = vmatprep.subr.bf16.mxu0 0
        %476 = vmatpush1.bf16.msra.mxu0 %v457
        %477 = vmatprep.subr.bf16.mxu0 0
        %478 = vmatpush1.bf16.msra.mxu0 %v456
        %479 = vmatprep.subr.bf16.mxu0 0
        %480 = vmatpush1.bf16.msra.mxu0 %v455
        %481 = vmatprep.subr.bf16.mxu0 0
        %482 = vmatpush1.bf16.msra.mxu0 %v454
        %483 = vmatprep.subr.bf16.mxu0 0
        %484 = vmatpush1.bf16.msra.mxu0 %v453
        %485 = vmatprep.subr.bf16.mxu0 0
        %486 = vmatpush2.bf16.msra.mxu0 0
        %487 = vmatprep.subr.bf16.mxu0 0
        %488 = vmatpush2.bf16.msra.mxu0 0
        %489 = vmatprep.subr.bf16.mxu0 0
        %490 = vmatpush2.bf16.msra.mxu0 0
        %491 = vmatprep.subr.bf16.mxu0 0
        %492 = vmatpush2.bf16.msra.mxu0 0
        %493 = vmatprep.subr.bf16.mxu0 0
        %494 = vmatpush2.bf16.msra.mxu0 0
        %495 = vmatprep.subr.bf16.mxu0 0
        %496 = vmatpush2.bf16.msra.mxu0 0
        %497 = vmatprep.subr.bf16.mxu0 0
        %498 = vmatpush2.bf16.msra.mxu0 0
        %499 = vmatprep.subr.bf16.mxu0 0
        %500 = vmatpush2.bf16.msra.mxu0 0
        %501 = vmatprep.mubr.bf16.mxu0 0
        %502 = vmatmul.mubr.bf16.gmra.mxu0 %v398
        %v503 = vpop.f32.mrf.mxu0
        %v504 = vadd.f32 %v420, %v503
        %v505 = vpop.f32.mrf.mxu0
        %v506 = vpop.f32.mrf.mxu0
        %v507 = vadd.f32 %v420, %v506
        %v508 = vpop.f32.mrf.mxu0
        %509 = vdwg.mxu0
        %vm510 = vcmp.gt.f32.partialorder %v504, 0.0
        %vm511 = vcmp.gt.f32.partialorder %v507, 0.0
        %v512 = vsel %vm510, 1, 0
        %v513 = vsel %vm511, 1, 0
        %v514 = vcvt.s32.f32 %v512
        %v515 = vcvt.s32.f32 %v513
        %v516 = vand.u32 2147483647, %v392
        %v517 = vand.u32 2147483647, %v393
        %v518 = vsub.f32 0.0, %v516
        %v519 = vsub.f32 0.0, %v517
        %v520 = vmul.f32 %v518, 1.442695
        %v521 = vpow.pop %v520
        %v522 = vmul.f32 %v519, 1.442695
        %v523 = vpow.pop %v522
        %v524 = vadd.f32 %v521, 1.0
        %v525 = vlog2.pop %v524
        %v526 = vmul.f32 %v525, 0.6931472
        %v527 = vmul.f32 -0.5, %v521
        %v528 = vadd.f32 %v527, 1.0
        %v529 = vmul.f32 %v528, %v521
        %v530 = vand.u32 2147483647, %v521
        %vm531 = vcmp.lt.f32.partialorder %v530, 0.0004427343
        %v532 = vsel %vm531, %v529, %v526
        %v533 = vadd.f32 %v523, 1.0
        %v534 = vlog2.pop %v533
        %v535 = vmul.f32 %v534, 0.6931472
        %v536 = vmul.f32 -0.5, %v523
        %v537 = vadd.f32 %v536, 1.0
        %v538 = vmul.f32 %v537, %v523
        %v539 = vand.u32 2147483647, %v523
        %vm540 = vcmp.lt.f32.partialorder %v539, 0.0004427343
        %v541 = vsel %vm540, %v538, %v535
        %v542 = vmin.f32 %v392, 0.0
        %v543 = vmin.f32 %v393, 0.0
        %v544 = vsub.f32 %v542, %v532
        %v545 = vsub.f32 %v543, %v541
        %v546 = vmax.f32 %v544, -16.118095
        %v547 = vmax.f32 %v545, -16.118095
        %v548 = vmin.f32 %v546, -1.0000001e-07
        %v549 = vmin.f32 %v547, -1.0000001e-07
        %v550 = vmax.f32 %v392, 0.0
        %v551 = vmax.f32 %v393, 0.0
        %v552 = vsub.f32 0.0, %v550
        %v553 = vsub.f32 0.0, %v551
        %v554 = vsub.f32 %v552, %v532
        %v555 = vsub.f32 %v553, %v541
        %v556 = vmax.f32 %v554, -16.118095
        %v557 = vmax.f32 %v555, -16.118095
        %v558 = vmin.f32 %v556, -1.0000001e-07
        %v559 = vmin.f32 %v557, -1.0000001e-07
        %v560 = vmul.f32 %v548, %v396
        %v561 = vmul.f32 %v549, %v397
        %v562 = vsub.f32 1.0, %v396
        %v563 = vsub.f32 1.0, %v397
        %v564 = vmul.f32 %v562, %v514
        %v565 = vmul.f32 %v563, %v515
        %v566 = vmul.f32 %v564, %v558
        %v567 = vmul.f32 %v565, %v559
        %v568 = vadd.f32 %v560, %v566
        %v569 = vadd.f32 %v561, %v567
        %v570 = vsub.f32 0.0, %v568
        %v571 = vsub.f32 0.0, %v569
        %572 = vadd.xlane.f32.xlu0 %v570
        %v573 = vpop.xlane.xlu0 %572
        %574 = vadd.xlane.f32.xlu0 %v571
        %v575 = vpop.xlane.xlu0 %574
        %v576 = vcvt.s32.f32 %v388
        %v577 = vcvt.s32.f32 %v389
        %v578 = vmul.f32 %v573, %v576
        %v579 = vmul.f32 %v575, %v577
        %vm580 = vcmask 7168
        %v581 = vsel %vm580, %v578, 0.0
        %v582 = vsel %vm580, %v579, 0.0
        %v583 = vadd.f32 %v581, %v582
        %584 = vadd.xlane.f32.xlu0 %v583
        %v585 = vpop.xlane.xlu0 %584
        %v586 = vrot.slane %v585, 4
        %v587 = vadd.f32 %v585, %v586
        %v588 = vrot.slane %v587, 2
        %v589 = vadd.f32 %v587, %v588
        %v590 = vrot.slane %v589, 1
        %v591 = vadd.f32 %v589, %v590
        %s592 = vtos %v591
        %v593 = vstv %s592
        %594 = vst [vmem:[%s353] sm:$0x1] %v593
        %v595 = vld [vmem:[#allocation8] sm:$0xff]
        %v596 = vld [vmem:[#allocation8 + $0x8] sm:$0xff]
        %v597 = vld [vmem:[#allocation8 + $0x10] sm:$0xff]
        %v598 = vld [vmem:[#allocation8 + $0x18] sm:$0xff]
        %v599 = vld [vmem:[#allocation8 + $0x20] sm:$0xff]
        %v600 = vld [vmem:[#allocation8 + $0x28] sm:$0xff]
        %v601 = vld [vmem:[#allocation8 + $0x30] sm:$0xff]
        %v602 = vld [vmem:[#allocation8 + $0x38] sm:$0xff]
        %v603 = vld [vmem:[#allocation8 + $0x40] sm:$0xff]
        %v604 = vld [vmem:[#allocation8 + $0x48] sm:$0xff]
        %v605 = vld [vmem:[#allocation8 + $0x50] sm:$0xff]
        %v606 = vld [vmem:[#allocation8 + $0x58] sm:$0xff]
        %v607 = vld [vmem:[#allocation8 + $0x60] sm:$0xff]
        %v608 = vld [vmem:[#allocation8 + $0x68] sm:$0xff]
        %v609 = vld [vmem:[#allocation8 + $0x70] sm:$0xff]
        %v610 = vld [vmem:[#allocation8 + $0x78] sm:$0xff]
        %611 = vmatprep.subr.mxu0 0.0
        %612 = vmatpush1.msra.mxu0 %v610
        %613 = vmatprep.subr.mxu0 0.0
        %614 = vmatpush1.msra.mxu0 %v609
        %615 = vmatprep.subr.mxu0 0.0
        %616 = vmatpush1.msra.mxu0 %v608
        %617 = vmatprep.subr.mxu0 0.0
        %618 = vmatpush1.msra.mxu0 %v607
        %619 = vmatprep.subr.mxu0 0.0
        %620 = vmatpush1.msra.mxu0 %v606
        %621 = vmatprep.subr.mxu0 0.0
        %622 = vmatpush1.msra.mxu0 %v605
        %623 = vmatprep.subr.mxu0 0.0
        %624 = vmatpush1.msra.mxu0 %v604
        %625 = vmatprep.subr.mxu0 0.0
        %626 = vmatpush1.msra.mxu0 %v603
        %627 = vmatprep.subr.mxu0 0.0
        %628 = vmatpush1.msra.mxu0 %v602
        %629 = vmatprep.subr.mxu0 0.0
        %630 = vmatpush1.msra.mxu0 %v601
        %631 = vmatprep.subr.mxu0 0.0
        %632 = vmatpush1.msra.mxu0 %v600
        %633 = vmatprep.subr.mxu0 0.0
        %634 = vmatpush1.msra.mxu0 %v599
        %635 = vmatprep.subr.mxu0 0.0
        %636 = vmatpush1.msra.mxu0 %v598
        %637 = vmatprep.subr.mxu0 0.0
        %638 = vmatpush1.msra.mxu0 %v597
        %639 = vmatprep.subr.mxu0 0.0
        %640 = vmatpush1.msra.mxu0 %v596
        %641 = vmatprep.subr.mxu0 0.0
        %642 = vmatpush1.msra.mxu0 %v595
        %643 = vmatprep.subr.mxu0 0.0
        %644 = vmatpush2.msra.mxu0 0.0
        %645 = vmatprep.subr.mxu0 0.0
        %646 = vmatpush2.msra.mxu0 0.0
        %647 = vmatprep.subr.mxu0 0.0
        %648 = vmatpush2.msra.mxu0 0.0
        %649 = vmatprep.subr.mxu0 0.0
        %650 = vmatpush2.msra.mxu0 0.0
        %651 = vmatprep.subr.mxu0 0.0
        %652 = vmatpush2.msra.mxu0 0.0
        %653 = vmatprep.subr.mxu0 0.0
        %654 = vmatpush2.msra.mxu0 0.0
        %655 = vmatprep.subr.mxu0 0.0
        %656 = vmatpush2.msra.mxu0 0.0
        %657 = vmatprep.subr.mxu0 0.0
        %658 = vmatpush2.msra.mxu0 0.0
        %659 = vmatprep.subr.mxu0 0.0
        %660 = vmatpush2.msra.mxu0 0.0
        %661 = vmatprep.subr.mxu0 0.0
        %662 = vmatpush2.msra.mxu0 0.0
        %663 = vmatprep.subr.mxu0 0.0
        %664 = vmatpush2.msra.mxu0 0.0
        %665 = vmatprep.subr.mxu0 0.0
        %666 = vmatpush2.msra.mxu0 0.0
        %667 = vmatprep.subr.mxu0 0.0
        %668 = vmatpush2.msra.mxu0 0.0
        %669 = vmatprep.subr.mxu0 0.0
        %670 = vmatpush2.msra.mxu0 0.0
        %671 = vmatprep.subr.mxu0 0.0
        %672 = vmatpush2.msra.mxu0 0.0
        %673 = vmatprep.subr.mxu0 0.0
        %674 = vmatpush2.msra.mxu0 0.0
        %675 = vmatprep.mubr.f32.mxu0 0.0
        %676 = vmatmul.mubr.f32.gmra.mxu0 %v544
        %v677 = vpop.f32.mrf.mxu0
        %v678 = vadd.f32 0.0, %v677
        %v679 = vpop.f32.mrf.mxu0
        %680 = vmatprep.mubr.f32.mxu0 0.0
        %681 = vmatmul.mubr.f32.gmra.mxu0 %v545
        %v682 = vpop.f32.mrf.mxu0
        %v683 = vadd.f32 0.0, %v682
        %v684 = vpop.f32.mrf.mxu0
        %685 = vdwg.mxu0
        %v686 = vmul.f32 %v678, 1.442695
        %v687 = vpow.pop %v686
        %v688 = vmul.f32 %v683, 1.442695
        %v689 = vpow.pop %v688
        %690 = vst [vmem:[%s360] sm:$0xff] %v687
        %691 = vst [vmem:[%s360 + $0x8] sm:$0xff] %v689
        %s692 = sand.u32 %s154, 1
        %s693 = scalar_lea.sflag [#allocation4], %s692
        %s694 = sand.u32 %s154, 1
        %s695 = scalar_lea.vmem [#allocation10], %s694
        %s696 = sand.u32 %s180, 1
        %s697 = scalar_lea.sflag [#allocation12], %s696
        %s698 = sand.u32 %s180, 1
        %s699 = smul.addr %s698, 16
        %s700 = scalar_lea.vmem [#allocation11], %s699
        // Predicated region
        $region57: #{tpu_custom_call.1} parent=39 // pred_check
          %p701 = pneg %p164
        $region58: #{tpu_custom_call.1} parent=39 // pred_check_branch
          %703 = sbr.rel (%p701) target = $region60
        $region59: #{tpu_custom_call.1} parent=39 // pred_region
          %s705 = ssub.s32 16, 16
          %706 = vsyncadd %s693, %s705
          %s707 = smul.addr %s31, 16
          %s708 = scalar_lea.hbm %s5, %s707
          %s710 = sshll.u32 %s695, 4
          %s711 = int_to_ptr.vmem [resolvable:$true] %s710
          %713 = dma.vmem_to_hbm [thread:$0]  %s711, 16, %s708, %s693
        $region60: #{tpu_custom_call.1} parent=39 // pred_fallthru
          _
        // Predicated region
        $region61: #{tpu_custom_call.1} parent=39 // pred_check
          %p714 = pneg %p190
        $region62: #{tpu_custom_call.1} parent=39 // pred_check_branch
          %716 = sbr.rel (%p714) target = $region64
        $region63: #{tpu_custom_call.1} parent=39 // pred_region
          %s717 = smul.u32 2, %s31
          %s718 = ssub.s32 3, %s717
          %p719 = scmp.lt.s32.totalorder %s718, 2
          %s720 = scalar_select %p719, %s718, 2
          %s721 = smul.u32 128, %s720
          %s723 = ssub.s32 256, %s721
          %724 = vsyncadd %s697, %s723
          %p725 = scmp.ne.s32.totalorder 0, %s721
          %s726 = smul.addr %s717, 128
          %s727 = scalar_lea.hbm %s6, %s726
          %s728 = smul.u32 8, %s720
          %s729 = sshll.u32 %s700, 4
          %s730 = int_to_ptr.vmem [resolvable:$true] %s729
          %s731 = sshll.u32 %s728, 4
          %735 = dma.vmem_to_hbm [thread:$0]  (%p725), %s730, %s731, %s727, %s697, 128, 128, 8
        $region64: #{tpu_custom_call.1} parent=39 // pred_fallthru
          _
      $region40: #{tpu_custom_call.1} parent=5 // pred_fallthru
        _
      %p736 = scmp.le.s32.totalorder 2, %s26
      // Predicated region
      $region65: #{tpu_custom_call.1} parent=5 // pred_check
        %p737 = pneg %p736
      $region66: #{tpu_custom_call.1} parent=5 // pred_check_branch
        %739 = sbr.rel (%p737) target = $region68
      $region67: #{tpu_custom_call.1} parent=5 // pred_region
        %s740 = ssub.s32 %s26, 2
        // Predicated region
        $region69: #{tpu_custom_call.1} parent=67 // pred_check
          %p741 = pneg %p170
        $region70: #{tpu_custom_call.1} parent=67 // pred_check_branch
          %743 = sbr.rel (%p741) target = $region72
        $region71: #{tpu_custom_call.1} parent=67 // pred_region
          %s744 = sand.u32 %s155, 1
          %s745 = scalar_lea.sflag [#allocation4], %s744
          %s746 = sand.u32 %s155, 1
          %s747 = scalar_lea.vmem [#allocation10], %s746
          %748 = dma.done %s745, 16
        $region72: #{tpu_custom_call.1} parent=67 // pred_fallthru
          _
        // Predicated region
        $region73: #{tpu_custom_call.1} parent=67 // pred_check
          %p749 = pneg %p196
        $region74: #{tpu_custom_call.1} parent=67 // pred_check_branch
          %751 = sbr.rel (%p749) target = $region76
        $region75: #{tpu_custom_call.1} parent=67 // pred_region
          %s752 = sand.u32 %s181, 1
          %s753 = scalar_lea.sflag [#allocation12], %s752
          %s754 = sand.u32 %s181, 1
          %s755 = smul.addr %s754, 16
          %s756 = scalar_lea.vmem [#allocation11], %s755
          %757 = dma.done %s753, 256
        $region76: #{tpu_custom_call.1} parent=67 // pred_fallthru
          _
      $region68: #{tpu_custom_call.1} parent=5 // pred_fallthru
        _
    $region6: #{tpu_custom_call.1} parent=1 // loop_footer
      %s30 = sadd.s32 1, %s26
    $region7: #{tpu_custom_call.1} parent=1 // loop_footer_branch
      %25 = sbr.rel target = $region3
    $region8: #{tpu_custom_call.1} parent=1 // loop_exit
      _
    %758 = vsyncpa [#allocation3], 1
    %s759 = scalar_lea.sflag [#allocation3], 1
    %760 = vsyncpa %s759, 1
    %761 = vsyncpa [#allocation6], 1
    %s762 = scalar_lea.sflag [#allocation6], 1
    %763 = vsyncpa %s762, 1
    %764 = vsyncpa [#allocation9], 1
    %765 = vsyncpa [#allocation4], 1
    %s766 = scalar_lea.sflag [#allocation4], 1
    %767 = vsyncpa %s766, 1
    %768 = vsyncpa [#allocation12], 1
    %s769 = scalar_lea.sflag [#allocation12], 1
    %770 = vsyncpa %s769, 1

</llo_original>
